<compile_context>
chip_gen: v6e
topology: v6e:2x2x1
jax: 0.10.0
libtpu: 0.0.40
codegen_flags: <defaults>
</compile_context>

<pallas_src>
import functools
from dataclasses import dataclass

import jax
import jax.numpy as jnp
from jax.experimental import pallas as pl
from jax.experimental.pallas import tpu as pltpu


@dataclass
class Qwen2Config:
    max_position_embeddings: int = 128
    rope_theta: float = 10000.0
    hidden_size: int = 64
    num_attention_heads: int = 2
    # partial_rotary_factor defaults to 1.0 (attribute absent in torch config)


def compute_default_rope_parameters(config: Qwen2Config):
    """Mirror of Qwen2RotaryEmbedding._compute_default_rope_parameters."""
    base = config.rope_theta
    partial_rotary_factor = 1.0
    head_dim = config.hidden_size // config.num_attention_heads
    dim = int(head_dim * partial_rotary_factor)
    attention_factor = 1.0
    exponents = jnp.arange(0, dim, 2, dtype=jnp.float32) / float(dim)
    inv_freq = 1.0 / (base ** exponents)
    return inv_freq.astype(jnp.float32), attention_factor, dim


def _rope_kernel(inv_ref, pos_ref, cos_ref, sin_ref, *, attention_scaling):
    # inv_ref : (1, half)          float32   (frequencies on the lane axis)
    # pos_ref : (block_rows, 1)    float32   (rows on the sublane axis)
    # cos_ref : (block_rows, dim)  out dtype
    # sin_ref : (block_rows, dim)  out dtype
    inv = inv_ref[...]                      # (1, half)
    pos = pos_ref[...]                      # (block_rows, 1)

    # Outer product on the VPU (do NOT use the MXU for a degenerate K=1 matmul).
    freqs = pos * inv                       # (block_rows, half)

    c = jnp.cos(freqs)
    s = jnp.sin(freqs)
    if attention_scaling != 1.0:            # static skip of the common *1.0 case
        c = c * attention_scaling
        s = s * attention_scaling

    # emb = cat((freqs, freqs), -1): duplicate the half-width result in
    # registers (XLU lane work, co-issues with the VALU-bound sin/cos) and do a
    # single unmasked full-width store per output instead of two masked halves.
    cos_ref[...] = jnp.concatenate([c, c], axis=-1).astype(cos_ref.dtype)
    sin_ref[...] = jnp.concatenate([s, s], axis=-1).astype(sin_ref.dtype)


# Rows per grid step (cap). Footprint at 4096 rows, dim=128, f32:
#   outputs: 2 * 4096*128*4B * 2 buffers = 8 MiB
#   positions (block_rows,1) lane-padded: 2 * 4096*128*4B = 4 MiB
# -> ~12 MiB, comfortably inside the explicit 32 MiB VMEM limit below on
# v5e/v6e/v7x, while a 4096-row step amortizes the ~0.35 us per-step overhead.
_MAX_BLOCK_ROWS = 4096
_VMEM_LIMIT_BYTES = 32 * 1024 * 1024


def _pick_block_rows(rows: int, max_block_rows: int) -> int:
    """Pick a sublane-legal row block with >= 2 grid steps when rows >= 16."""
    cap = max(8, (max_block_rows // 8) * 8)
    if rows < 16:
        return rows                          # single block == full array
    # >= 2 grid steps so ("parallel",) can split rows across both v7x cores.
    half_rows = -(-rows // 2)                # cdiv(rows, 2)
    half_rows = ((half_rows + 7) // 8) * 8   # multiple of 8 -> legal sublane tile
    return min(cap, half_rows)


def qwen2_rotary_embedding(x, position_ids, inv_freq, attention_scaling,
                           *, positions_shared_across_batch: bool = False,
                           max_block_rows: int = _MAX_BLOCK_ROWS):
    """Returns (cos, sin), each of shape (B, S, dim) in x.dtype."""
    B, S = position_ids.shape
    half = int(inv_freq.shape[0])
    dim = 2 * half
    out_dtype = x.dtype

    # Batch dedup: when position rows are known-identical across batch (the
    # common arange case), generate a single (S, dim) table and broadcast.
    if positions_shared_across_batch and B > 1:
        cos1, sin1 = qwen2_rotary_embedding(
            x, position_ids[:1], inv_freq, attention_scaling,
            max_block_rows=max_block_rows)
        return (jnp.broadcast_to(cos1, (B, S, dim)),
                jnp.broadcast_to(sin1, (B, S, dim)))

    rows = B * S
    block_rows = _pick_block_rows(rows, max_block_rows)
    num_blocks = pl.cdiv(rows, block_rows)   # ragged last block handled by Pallas

    pos_col = position_ids.reshape(rows, 1).astype(jnp.float32)   # rows -> sublanes
    inv_2d = inv_freq.reshape(1, half).astype(jnp.float32)        # freqs -> lanes

    kernel = functools.partial(_rope_kernel,
                               attention_scaling=float(attention_scaling))

    cos2d, sin2d = pl.pallas_call(
        kernel,
        out_shape=(
            jax.ShapeDtypeStruct((rows, dim), out_dtype),
            jax.ShapeDtypeStruct((rows, dim), out_dtype),
        ),
        grid_spec=pltpu.PrefetchScalarGridSpec(
            num_scalar_prefetch=0,
            grid=(num_blocks,),
            in_specs=[
                pl.BlockSpec((1, half), lambda i: (0, 0)),           # inv_freq
                pl.BlockSpec((block_rows, 1), lambda i: (i, 0)),     # positions
            ],
            out_specs=[
                pl.BlockSpec((block_rows, dim), lambda i: (i, 0)),   # cos
                pl.BlockSpec((block_rows, dim), lambda i: (i, 0)),   # sin
            ],
        ),
        compiler_params=pltpu.CompilerParams(
            dimension_semantics=("parallel",),
            vmem_limit_bytes=_VMEM_LIMIT_BYTES,
        ),
    )(inv_2d, pos_col)

    return cos2d.reshape(B, S, dim), sin2d.reshape(B, S, dim)


def reference(x, position_ids, inv_freq, attention_scaling):
    pos = position_ids.astype(jnp.float32)
    freqs = pos[:, :, None] * inv_freq[None, None, :]
    emb = jnp.concatenate([freqs, freqs], axis=-1)
    cos = (jnp.cos(emb) * attention_scaling).astype(x.dtype)
    sin = (jnp.sin(emb) * attention_scaling).astype(x.dtype)
    return cos, sin


if __name__ == "__main__":
    key = jax.random.PRNGKey(0)
    k1, k2, k3 = jax.random.split(key, 3)

    # --- Case 1: toy module config (hidden=64, 2 heads -> dim=32), f32.
    #     rows=16 -> block_rows=8, grid=2 (exercises the multi-core split path).
    cfg = Qwen2Config(max_position_embeddings=128, rope_theta=10000.0,
                      hidden_size=64, num_attention_heads=2)
    inv_freq, scaling, dim = compute_default_rope_parameters(cfg)
    B, S = 2, 8
    x = jax.random.normal(k1, (B, S, cfg.hidden_size), dtype=jnp.float32)
    pos_ids = jnp.broadcast_to(jnp.arange(S, dtype=jnp.int32)[None, :], (B, S))
    cos, sin = jax.block_until_ready(
        qwen2_rotary_embedding(x, pos_ids, inv_freq, scaling))
    cos_r, sin_r = reference(x, pos_ids, inv_freq, scaling)
    assert cos.shape == (B, S, dim) and sin.shape == (B, S, dim)
    assert cos.dtype == x.dtype and sin.dtype == x.dtype
    assert jnp.allclose(cos, cos_r, atol=1e-5, rtol=1e-5)
    assert jnp.allclose(sin, sin_r, atol=1e-5, rtol=1e-5)

    # --- Case 2: production-like head_dim=128 (dim=128), bf16 output dtype.
    cfg2 = Qwen2Config(max_position_embeddings=4096, rope_theta=10000.0,
                       hidden_size=256, num_attention_heads=2)
    inv_freq2, scaling2, dim2 = compute_default_rope_parameters(cfg2)
    B2, S2 = 2, 64
    x2 = jax.random.normal(k2, (B2, S2, cfg2.hidden_size), dtype=jnp.bfloat16)
    pos2 = jnp.broadcast_to(jnp.arange(S2, dtype=jnp.int32)[None, :], (B2, S2))
    cos2, sin2 = jax.block_until_ready(
        qwen2_rotary_embedding(x2, pos2, inv_freq2, scaling2))
    cos2_r, sin2_r = reference(x2, pos2, inv_freq2, scaling2)
    assert cos2.dtype == jnp.bfloat16 and cos2.shape == (B2, S2, dim2)
    assert jnp.allclose(cos2.astype(jnp.float32), cos2_r.astype(jnp.float32), atol=1e-2)
    assert jnp.allclose(sin2.astype(jnp.float32), sin2_r.astype(jnp.float32), atol=1e-2)

    # --- Case 3: ragged multi-block path (rows=600, block=128 -> grid=5,
    #     last block 88 rows, masked on writeback; no host pad / slice).
    B3, S3 = 2, 300
    x3 = jax.random.normal(k3, (B3, S3, cfg2.hidden_size), dtype=jnp.float32)
    pos3 = jnp.broadcast_to(jnp.arange(S3, dtype=jnp.int32)[None, :], (B3, S3))
    cos3, sin3 = jax.block_until_ready(
        qwen2_rotary_embedding(x3, pos3, inv_freq2, scaling2, max_block_rows=128))
    cos3_r, sin3_r = reference(x3, pos3, inv_freq2, scaling2)
    assert jnp.allclose(cos3, cos3_r, atol=1e-5, rtol=1e-5)
    assert jnp.allclose(sin3, sin3_r, atol=1e-5, rtol=1e-5)

    # --- Case 4: batch-dedup fast path (positions identical across batch).
    cos4, sin4 = jax.block_until_ready(
        qwen2_rotary_embedding(x, pos_ids, inv_freq, scaling,
                               positions_shared_across_batch=True))
    assert jnp.allclose(cos4, cos_r, atol=1e-5, rtol=1e-5)
    assert jnp.allclose(sin4, sin_r, atol=1e-5, rtol=1e-5)

    print("KERNEL_OK")
</pallas_src>

<mosaic_0001>
module attributes {stable_mosaic.version = 11 : i64} {
  func.func @_rope_kernel(%arg0: i32, %arg1: memref<1x16xf32, #tpu.memory_space<vmem>>, %arg2: memref<8x1xf32, #tpu.memory_space<vmem>>, %arg3: memref<8x32xf32, #tpu.memory_space<vmem>>, %arg4: memref<8x32xf32, #tpu.memory_space<vmem>>) attributes {dimension_semantics = [#tpu.dimension_semantics<parallel>], iteration_bounds = array<i64: 2>, scalar_prefetch = 0 : i64, scratch_operands = 0 : i64, tpu.core_type = #tpu.core_type<tc>, window_params = [{pipeline_mode = #tpu.pipeline_mode<synchronous>, transform_indices = @transform_0, window_bounds = array<i64: 1, 16>}, {transform_indices = @transform_1, window_bounds = array<i64: 8, 1>}, {transform_indices = @transform_2, window_bounds = array<i64: 8, 32>}, {transform_indices = @transform_3, window_bounds = array<i64: 8, 32>}]} {
    %c0 = arith.constant 0 : index
    %c0_0 = arith.constant 0 : index
    %0 = vector.load %arg1[%c0, %c0_0] : memref<1x16xf32, #tpu.memory_space<vmem>>, vector<1x16xf32>
    %c0_1 = arith.constant 0 : index
    %c0_2 = arith.constant 0 : index
    %1 = vector.load %arg2[%c0_1, %c0_2] : memref<8x1xf32, #tpu.memory_space<vmem>>, vector<8x1xf32>
    %2 = vector.broadcast %1 : vector<8x1xf32> to vector<8x16xf32>
    %3 = vector.broadcast %0 : vector<1x16xf32> to vector<8x16xf32>
    %4 = arith.mulf %2, %3 : vector<8x16xf32>
    %5 = math.cos %4 : vector<8x16xf32>
    %6 = math.sin %4 : vector<8x16xf32>
    %7 = tpu.concatenate %5, %5 in 1 : vector<8x16xf32>, vector<8x16xf32> -> vector<8x32xf32>
    %c0_3 = arith.constant 0 : index
    %c0_4 = arith.constant 0 : index
    %8 = vector.load %arg3[%c0_3, %c0_4] : memref<8x32xf32, #tpu.memory_space<vmem>>, vector<8x32xf32>
    tpu.vector_store %arg3[%c0_3, %c0_4], %7 {strides = array<i32>} : memref<8x32xf32, #tpu.memory_space<vmem>>, vector<8x32xf32>,
    %9 = tpu.concatenate %6, %6 in 1 : vector<8x16xf32>, vector<8x16xf32> -> vector<8x32xf32>
    %c0_5 = arith.constant 0 : index
    %c0_6 = arith.constant 0 : index
    %10 = vector.load %arg4[%c0_5, %c0_6] : memref<8x32xf32, #tpu.memory_space<vmem>>, vector<8x32xf32>
    tpu.vector_store %arg4[%c0_5, %c0_6], %9 {strides = array<i32>} : memref<8x32xf32, #tpu.memory_space<vmem>>, vector<8x32xf32>,
    return
  }
  func.func @transform_0(%arg0: i32) -> (i32, i32) {
    %c0_i32 = arith.constant 0 : i32
    %c0_i32_0 = arith.constant 0 : i32
    %c0_i32_1 = arith.constant 0 : i32
    return %c0_i32, %c0_i32_0 : i32, i32
  }
  func.func @transform_1(%arg0: i32) -> (i32, i32) {
    %c0_i32 = arith.constant 0 : i32
    %c0_i32_0 = arith.constant 0 : i32
    return %arg0, %c0_i32 : i32, i32
  }
  func.func @transform_2(%arg0: i32) -> (i32, i32) {
    %c0_i32 = arith.constant 0 : i32
    %c0_i32_0 = arith.constant 0 : i32
    return %arg0, %c0_i32 : i32, i32
  }
  func.func @transform_3(%arg0: i32) -> (i32, i32) {
    %c0_i32 = arith.constant 0 : i32
    %c0_i32_0 = arith.constant 0 : i32
    return %arg0, %c0_i32 : i32, i32
  }
}

</mosaic_0001>

<llo_original>
// kernel: tpu_custom_call.1
$region0: #{tpu_custom_call.1}
  #allocation0 [shape = 'u32[]', space=smem, size = 0x4, offset = 0x4, fixed_abs, tag = 'smem constant byte address 0x4 - core index']
  #allocation1 [shape = 'u32[144,128]{1,0:T(1,128)}', space=vmem, size = 0x12000, scoped, tag = 'internal scratch']
  %s0 = inlined_call_operand.vmem [shape: f32[1,16], index: 0, kind: input, shape index: {}]
  %s1 = inlined_call_operand.vmem [shape: f32[16,1], index: 1, kind: input, shape index: {}]
  %s2 = inlined_call_operand.hbm [shape: f32[16,32], index: 2, kind: output, shape index: {0}]
  %s3 = inlined_call_operand.hbm [shape: f32[16,32], index: 3, kind: output, shape index: {1}]
  %4 = xla_tuple %s2, %s3
  %s5 = sld [smem:[#allocation0]]
  $region49: #{tpu_custom_call.1} parent=0
    _
  %s7 = ssub.s32 1, %s5
  %s8 = scalar_select 0, %s7, %s5
  $region1: #{tpu_custom_call.1} parent=0
    #allocation2 [shape = 'u8[8192]{0}', space=vmem, size = 0x2000, scoped, tag = 'output window, operand 0']
    #allocation3 [shape = 's32[2]{0}', space=sflag, size = 0x8, scoped, tag = 'scoped memory for tpu_custom_call.1']
    #allocation4 [shape = 'u8[8192]{0}', space=vmem, size = 0x2000, scoped, tag = 'output window, operand 1']
    #allocation5 [shape = 's32[2]{0}', space=sflag, size = 0x8, scoped, tag = 'scoped memory for tpu_custom_call.1']
    %9 = vsyncpa [#allocation3], 0
    %s10 = scalar_lea.sflag [#allocation3], 1
    %11 = vsyncpa %s10, 0
    %12 = vsyncpa [#allocation5], 0
    %s13 = scalar_lea.sflag [#allocation5], 1
    %14 = vsyncpa %s13, 0
    loop: start=0, step=1, limit=4
    $region2: #{tpu_custom_call.1} parent=1 // loop_pre_header
      _
    $region3: #{tpu_custom_call.1} parent=1 // loop_header
      %s16 = sphi 0, %s20
      %p17 = scmp.ge.s32.totalorder %s16, 4
      %s24 = sphi 0, %s24
      %s26 = sphi 0, %s24
      %s27 = sphi 0, %s26
      %s41 = sphi 0, %s27
      %s47 = sphi 0, %s49
      %s50 = sphi 0, %s47
      %s51 = sphi 0, %s50
      %s67 = sphi 0, %s51
      %s73 = sphi 0, %s75
      %s76 = sphi 0, %s73
      %s77 = sphi 0, %s76
      %s93 = sphi 0, %s77
      %s99 = sphi 0, %s101
      %s102 = sphi 0, %s99
      %s103 = sphi 0, %s102
      %s119 = sphi 0, %s103
    $region4: #{tpu_custom_call.1} parent=1 // loop_header_branch
      %19 = sbr.rel (%p17) target = $region8
    $region5: #{tpu_custom_call.1} parent=1 // loop_body
      %s21 = ssub.s32 %s16, 1
      %s22 = ssub.s32 %s16, 2
      %s23 = sadd.s32 %s16, 1
      %s25 = sadd.s32 %s24, 1
      %p28 = scmp.eq.s32.totalorder %s16, 1
      %p29 = scmp.ne.s32.totalorder %s24, %s26
      %p30 = scmp.eq.s32.totalorder %s16, 0
      %p31 = por %p29, %p30
      %p32 = scmp.ne.s32.totalorder %s24, %s26
      %p33 = scmp.eq.s32.totalorder %s21, 1
      %p34 = por %p32, %p33
      %p35 = scmp.ne.s32.totalorder %s26, %s27
      %p36 = scmp.eq.s32.totalorder %s21, 0
      %p37 = por %p35, %p36
      %p38 = scmp.ne.s32.totalorder %s26, %s27
      %p39 = scmp.eq.s32.totalorder %s22, 1
      %p40 = por %p38, %p39
      %p42 = scmp.ne.s32.totalorder %s27, %s41
      %p43 = scmp.eq.s32.totalorder %s22, 0
      %p44 = por %p42, %p43
      %s45 = ssub.s32 %s16, %s23
      %p46 = scmp.eq.s32.totalorder %s45, 0
      %s48 = sadd.s32 %s47, 1
      %s49 = scalar_select %p46, %s47, %s48
      %p52 = pneg %p46
      %p53 = scmp.eq.s32.totalorder %s16, 1
      %p54 = por %p52, %p53
      %p55 = scmp.ne.s32.totalorder %s47, %s50
      %p56 = scmp.eq.s32.totalorder %s16, 0
      %p57 = por %p55, %p56
      %p58 = scmp.ne.s32.totalorder %s47, %s50
      %p59 = scmp.eq.s32.totalorder %s21, 1
      %p60 = por %p58, %p59
      %p61 = scmp.ne.s32.totalorder %s50, %s51
      %p62 = scmp.eq.s32.totalorder %s21, 0
      %p63 = por %p61, %p62
      %p64 = scmp.ne.s32.totalorder %s50, %s51
      %p65 = scmp.eq.s32.totalorder %s22, 1
      %p66 = por %p64, %p65
      %p68 = scmp.ne.s32.totalorder %s51, %s67
      %p69 = scmp.eq.s32.totalorder %s22, 0
      %p70 = por %p68, %p69
      %s71 = ssub.s32 %s16, %s23
      %p72 = scmp.eq.s32.totalorder %s71, 0
      %s74 = sadd.s32 %s73, 1
      %s75 = scalar_select %p72, %s73, %s74
      %p78 = pneg %p72
      %p79 = scmp.eq.s32.totalorder %s16, 1
      %p80 = por %p78, %p79
      %p81 = scmp.ne.s32.totalorder %s73, %s76
      %p82 = scmp.eq.s32.totalorder %s16, 0
      %p83 = por %p81, %p82
      %p84 = scmp.ne.s32.totalorder %s73, %s76
      %p85 = scmp.eq.s32.totalorder %s21, 1
      %p86 = por %p84, %p85
      %p87 = scmp.ne.s32.totalorder %s76, %s77
      %p88 = scmp.eq.s32.totalorder %s21, 0
      %p89 = por %p87, %p88
      %p90 = scmp.ne.s32.totalorder %s76, %s77
      %p91 = scmp.eq.s32.totalorder %s22, 1
      %p92 = por %p90, %p91
      %p94 = scmp.ne.s32.totalorder %s77, %s93
      %p95 = scmp.eq.s32.totalorder %s22, 0
      %p96 = por %p94, %p95
      %s97 = ssub.s32 %s16, %s23
      %p98 = scmp.eq.s32.totalorder %s97, 0
      %s100 = sadd.s32 %s99, 1
      %s101 = scalar_select %p98, %s99, %s100
      %p104 = pneg %p98
      %p105 = scmp.eq.s32.totalorder %s16, 1
      %p106 = por %p104, %p105
      %p107 = scmp.ne.s32.totalorder %s99, %s102
      %p108 = scmp.eq.s32.totalorder %s16, 0
      %p109 = por %p107, %p108
      %p110 = scmp.ne.s32.totalorder %s99, %s102
      %p111 = scmp.eq.s32.totalorder %s21, 1
      %p112 = por %p110, %p111
      %p113 = scmp.ne.s32.totalorder %s102, %s103
      %p114 = scmp.eq.s32.totalorder %s21, 0
      %p115 = por %p113, %p114
      %p116 = scmp.ne.s32.totalorder %s102, %s103
      %p117 = scmp.eq.s32.totalorder %s22, 1
      %p118 = por %p116, %p117
      %p120 = scmp.ne.s32.totalorder %s103, %s119
      %p121 = scmp.eq.s32.totalorder %s22, 0
      %p122 = por %p120, %p121
      %p123 = scmp.le.s32.totalorder 1, %s16
      %p124 = scmp.lt.s32.totalorder %s16, 3
      %p125 = pnand %p123, %p124
      %p126 = pneg %p125
      // Predicated region
      $region9: #{tpu_custom_call.1} parent=5 // pred_check
        _
      $region10: #{tpu_custom_call.1} parent=5 // pred_check_branch
        %128 = sbr.rel (%p125) target = $region12
      $region11: #{tpu_custom_call.1} parent=5 // pred_region
        %s129 = ssub.s32 %s16, 1
        // Predicated region
        $region13: #{tpu_custom_call.1} parent=11 // pred_check
          %p130 = pneg %p37
        $region14: #{tpu_custom_call.1} parent=11 // pred_check_branch
          %132 = sbr.rel (%p130) target = $region16
        $region15: #{tpu_custom_call.1} parent=11 // pred_region
          _
        $region16: #{tpu_custom_call.1} parent=11 // pred_fallthru
          _
      $region12: #{tpu_custom_call.1} parent=5 // pred_fallthru
        _
      %p133 = scmp.lt.s32.totalorder %s16, 2
      // Predicated region
      $region17: #{tpu_custom_call.1} parent=5 // pred_check
        %p134 = pneg %p133
      $region18: #{tpu_custom_call.1} parent=5 // pred_check_branch
        %136 = sbr.rel (%p134) target = $region20
      $region19: #{tpu_custom_call.1} parent=5 // pred_region
        // Predicated region
        $region21: #{tpu_custom_call.1} parent=19 // pred_check
          %p137 = pneg %p57
        $region22: #{tpu_custom_call.1} parent=19 // pred_check_branch
          %139 = sbr.rel (%p137) target = $region24
        $region23: #{tpu_custom_call.1} parent=19 // pred_region
          %p140 = scmp.lt.s32.totalorder %s16, 1
          %s141 = scalar_select %p140, %s16, 1
          %s142 = smul.addr %s141, 8
          %s143 = scalar_lea.vmem %s1, %s142
        $region24: #{tpu_custom_call.1} parent=19 // pred_fallthru
          _
      $region20: #{tpu_custom_call.1} parent=5 // pred_fallthru
        _
      %p144 = scmp.le.s32.totalorder 1, %s16
      %p145 = scmp.lt.s32.totalorder %s16, 3
      %p146 = pnand %p144, %p145
      %p147 = pneg %p146
      // Predicated region
      $region25: #{tpu_custom_call.1} parent=5 // pred_check
        _
      $region26: #{tpu_custom_call.1} parent=5 // pred_check_branch
        %149 = sbr.rel (%p146) target = $region28
      $region27: #{tpu_custom_call.1} parent=5 // pred_region
        %s150 = ssub.s32 %s16, 1
        %p151 = pneg %p37
        %p152 = pneg %p34
        %p153 = scmp.lt.s32.totalorder %s21, 1
        %s154 = scalar_select %p153, %s21, 1
        %s155 = smul.addr %s154, 8
        %s156 = scalar_lea.vmem %s1, %s155
        %p157 = pneg %p63
        %p158 = pneg %p60
        %p159 = pneg %p89
        %p160 = pneg %p86
        %s161 = sand.u32 %s76, 1
        %s162 = scalar_lea.sflag [#allocation3], %s161
        %s163 = sand.u32 %s76, 1
        %s164 = smul.addr %s163, 8
        %s165 = scalar_lea.vmem [#allocation2], %s164
        %p166 = pneg %p115
        %p167 = pneg %p112
        %s168 = sand.u32 %s102, 1
        %s169 = scalar_lea.sflag [#allocation5], %s168
        %s170 = sand.u32 %s102, 1
        %s171 = smul.addr %s170, 8
        %s172 = scalar_lea.vmem [#allocation4], %s171
        %p173 = scmp.lt.s32.totalorder %s21, 1
        %s174 = scalar_select %p173, %s21, 1
        %s175 = smul.addr %s174, 8
        %s176 = scalar_lea.vmem %s1, %s175
        %v177 = vld [vmem:[%s0] sm:$0x1]
        %v178 = vld [vmem:[%s176] sm:$0xff]
        %180 = vset.pattern.permute.xlu0 0
        %181 = vperm.xlu0 %180, %v178
        %v182 = vpop.permute.xlu0 %181
        %v185 = vlaneseq
        %v186 = vshrl.u32 %v185, 7
        %v187 = vsub.s32 0, %v186
        %v188 = vrot.slane %v177, %v187
        %v190 = vmul.f32 %v182, %v188
        %v191 = vand.u32 2147483647, %v190
        %vm192 = vcmp.le.f32.partialorder %v191, 0.7853982
        %vm193 = vcmp.lt.s32.totalorder %v190, 0
        %v194 = vand.u32 %v190, 2139095040
        %v195 = vshrl.u32 %v194, 23
        %v196 = vsub.s32 %v195, 127
        %v197 = vand.u32 2147483647, %v190
        %v198 = vand.u32 %v197, 8388607
        %v199 = vor.u32 %v198, 8388608
        %v200 = vsub.s32 0, %v199
        %v201 = vadd.s32 %v196, 1
        %vm202 = vcmp.gt.s32.totalorder %v201, 0
        %v203 = vsel %vm202, %v201, 0
        %v204 = vshrl.u32 %v203, 5
        %v205 = vand.u32 %v203, 31
        %v206 = vsub.s32 32, %v205
        %v207 = vshrl.u32 683565275, %v206
        %v208 = vshll.u32 683565275, %v205
        %v209 = vshrl.u32 2475754826, %v206
        %v210 = vor.u32 %v208, %v209
        %v211 = vshll.u32 2475754826, %v205
        %v212 = vshrl.u32 2131351028, %v206
        %v213 = vor.u32 %v211, %v212
        %v214 = vshll.u32 2131351028, %v205
        %v215 = vshrl.u32 2102212464, %v206
        %v216 = vor.u32 %v214, %v215
        %v217 = vshll.u32 2102212464, %v205
        %v218 = vshrl.u32 920167782, %v206
        %v219 = vor.u32 %v217, %v218
        %v220 = vshll.u32 920167782, %v205
        %v221 = vshrl.u32 1326507024, %v206
        %v222 = vor.u32 %v220, %v221
        %vm223 = vcmp.lt.s32.totalorder %v204, 1
        %vm224 = vcmp.lt.s32.totalorder %v204, 2
        %vm225 = vcmp.lt.s32.totalorder %v204, 3
        %vm226 = vcmp.lt.s32.totalorder %v204, 4
        %v227 = vsel %vm223, %v207, %v210
        %v228 = vsel %vm226, %v216, 2102212464
        %v229 = vsel %vm225, %v213, %v228
        %v230 = vsel %vm224, %v227, %v229
        %v231 = vsel %vm223, %v210, %v213
        %v232 = vsel %vm226, %v219, 920167782
        %v233 = vsel %vm225, %v216, %v232
        %v234 = vsel %vm224, %v231, %v233
        %v235 = vsel %vm223, %v213, %v216
        %v236 = vsel %vm226, %v222, 1326507024
        %v237 = vsel %vm225, %v219, %v236
        %v238 = vsel %vm224, %v235, %v237
        %v239 = vshll.u32 %v199, 8
        %v240 = vmul.u32.u64.compose %v239, %v238
        %v241 = vextract.low.u32 %v240
        %v242 = vextract.high.u32 %v240
        %v243 = vmul.u32.u64.compose %v239, %v234
        %v244 = vextract.low.u32 %v243
        %v245 = vextract.high.u32 %v243
        %v246 = vmul.u32 %v239, %v230
        %v247 = vadd.s32 %v242, %v244
        %vm248 = vc.u32 %v242, %v244
        %v249 = vadd.s32 %v245, 1
        %v250 = vsel %vm248, %v249, %v245
        %v251 = vadd.s32 %v246, %v250
        %v252 = vadd.s32 %v251, 536870912
        %v253 = vshrl.u32 %v252, 30
        %v254 = vshll.u32 %v253, 30
        %v255 = vsub.s32 %v251, %v254
        %vm256 = vcmp.lt.s32.totalorder %v255, 0
        %v257 = vsub.s32 0, %v255
        %v258 = vsel %vm256, %v257, %v255
        %v259 = vclz %v258
        %v260 = vsub.s32 %v259, 2
        %vm261 = vcmp.gt.s32.totalorder 0, %v260
        %v262 = vsel %vm261, 0, %v260
        %v263 = vsub.s32 32, %v262
        %v264 = vshll.u32 %v255, %v262
        %v265 = vshrl.u32 %v247, %v263
        %v266 = vor.u32 %v264, %v265
        %v267 = vsub.s32 4294967266, %v262
        %v268 = vadd.s32 %v267, 127
        %v269 = vshll.u32 %v268, 23
        %v270 = vor.u32 4788187, %v269
        %v271 = vand.u32 2147483647, %v270
        %v273 = vcvt.s32.f32 %v266
        %v274 = vmul.f32 %v273, %v271
        %v275 = vxor.u32 %v274, 2147483648
        %v276 = vsel %vm193, %v275, %v274
        %v277 = vsub.s32 4, %v253
        %v278 = vsel %vm193, %v277, %v253
        %v279 = vsel %vm192, %v190, %v276
        %v280 = vsel %vm192, 0, %v278
        %v281 = vcosq.f32.pop %v279
        %v282 = vsinq.f32.pop %v279
        %vm283 = vweird.f32 %v190
        %v284 = vand.u32 %v280, 3
        %vm285 = vcmp.lt.s32.totalorder %v284, 2
        %vm286 = vcmp.eq.s32.totalorder %v284, 0
        %v287 = vxor.u32 %v282, 2147483648
        %v288 = vsel %vm286, %v281, %v287
        %vm289 = vcmp.eq.s32.totalorder %v284, 2
        %v290 = vxor.u32 %v281, 2147483648
        %v291 = vsel %vm289, %v290, %v282
        %v292 = vsel %vm285, %v288, %v291
        %v293 = vsel %vm283, nan, %v292
        %v294 = vand.u32 2147483647, %v190
        %vm295 = vcmp.le.f32.partialorder %v294, 0.7853982
        %vm296 = vcmp.lt.s32.totalorder %v190, 0
        %v297 = vand.u32 %v190, 2139095040
        %v298 = vshrl.u32 %v297, 23
        %v299 = vsub.s32 %v298, 127
        %v300 = vand.u32 2147483647, %v190
        %v301 = vand.u32 %v300, 8388607
        %v302 = vor.u32 %v301, 8388608
        %v303 = vsub.s32 0, %v302
        %v304 = vadd.s32 %v299, 1
        %vm305 = vcmp.gt.s32.totalorder %v304, 0
        %v306 = vsel %vm305, %v304, 0
        %v307 = vshrl.u32 %v306, 5
        %v308 = vand.u32 %v306, 31
        %v309 = vsub.s32 32, %v308
        %v310 = vshrl.u32 683565275, %v309
        %v311 = vshll.u32 683565275, %v308
        %v312 = vshrl.u32 2475754826, %v309
        %v313 = vor.u32 %v311, %v312
        %v314 = vshll.u32 2475754826, %v308
        %v315 = vshrl.u32 2131351028, %v309
        %v316 = vor.u32 %v314, %v315
        %v317 = vshll.u32 2131351028, %v308
        %v318 = vshrl.u32 2102212464, %v309
        %v319 = vor.u32 %v317, %v318
        %v320 = vshll.u32 2102212464, %v308
        %v321 = vshrl.u32 920167782, %v309
        %v322 = vor.u32 %v320, %v321
        %v323 = vshll.u32 920167782, %v308
        %v324 = vshrl.u32 1326507024, %v309
        %v325 = vor.u32 %v323, %v324
        %vm326 = vcmp.lt.s32.totalorder %v307, 1
        %vm327 = vcmp.lt.s32.totalorder %v307, 2
        %vm328 = vcmp.lt.s32.totalorder %v307, 3
        %vm329 = vcmp.lt.s32.totalorder %v307, 4
        %v330 = vsel %vm326, %v310, %v313
        %v331 = vsel %vm329, %v319, 2102212464
        %v332 = vsel %vm328, %v316, %v331
        %v333 = vsel %vm327, %v330, %v332
        %v334 = vsel %vm326, %v313, %v316
        %v335 = vsel %vm329, %v322, 920167782
        %v336 = vsel %vm328, %v319, %v335
        %v337 = vsel %vm327, %v334, %v336
        %v338 = vsel %vm326, %v316, %v319
        %v339 = vsel %vm329, %v325, 1326507024
        %v340 = vsel %vm328, %v322, %v339
        %v341 = vsel %vm327, %v338, %v340
        %v342 = vshll.u32 %v302, 8
        %v343 = vmul.u32.u64.compose %v342, %v341
        %v344 = vextract.low.u32 %v343
        %v345 = vextract.high.u32 %v343
        %v346 = vmul.u32.u64.compose %v342, %v337
        %v347 = vextract.low.u32 %v346
        %v348 = vextract.high.u32 %v346
        %v349 = vmul.u32 %v342, %v333
        %v350 = vadd.s32 %v345, %v347
        %vm351 = vc.u32 %v345, %v347
        %v352 = vadd.s32 %v348, 1
        %v353 = vsel %vm351, %v352, %v348
        %v354 = vadd.s32 %v349, %v353
        %v355 = vadd.s32 %v354, 536870912
        %v356 = vshrl.u32 %v355, 30
        %v357 = vshll.u32 %v356, 30
        %v358 = vsub.s32 %v354, %v357
        %vm359 = vcmp.lt.s32.totalorder %v358, 0
        %v360 = vsub.s32 0, %v358
        %v361 = vsel %vm359, %v360, %v358
        %v362 = vclz %v361
        %v363 = vsub.s32 %v362, 2
        %vm364 = vcmp.gt.s32.totalorder 0, %v363
        %v365 = vsel %vm364, 0, %v363
        %v366 = vsub.s32 32, %v365
        %v367 = vshll.u32 %v358, %v365
        %v368 = vshrl.u32 %v350, %v366
        %v369 = vor.u32 %v367, %v368
        %v370 = vsub.s32 4294967266, %v365
        %v371 = vadd.s32 %v370, 127
        %v372 = vshll.u32 %v371, 23
        %v373 = vor.u32 4788187, %v372
        %v374 = vand.u32 2147483647, %v373
        %v376 = vcvt.s32.f32 %v369
        %v377 = vmul.f32 %v376, %v374
        %v378 = vxor.u32 %v377, 2147483648
        %v379 = vsel %vm296, %v378, %v377
        %v380 = vsub.s32 4, %v356
        %v381 = vsel %vm296, %v380, %v356
        %v382 = vsel %vm295, %v190, %v379
        %v383 = vsel %vm295, 0, %v381
        %v384 = vcosq.f32.pop %v382
        %v385 = vsinq.f32.pop %v382
        %vm386 = vweird.f32 %v190
        %v387 = vadd.s32 %v383, 3
        %v388 = vand.u32 %v387, 3
        %vm389 = vcmp.lt.s32.totalorder %v388, 2
        %vm390 = vcmp.eq.s32.totalorder %v388, 0
        %v391 = vxor.u32 %v385, 2147483648
        %v392 = vsel %vm390, %v384, %v391
        %vm393 = vcmp.eq.s32.totalorder %v388, 2
        %v394 = vxor.u32 %v384, 2147483648
        %v395 = vsel %vm393, %v394, %v385
        %v396 = vsel %vm389, %v392, %v395
        %v397 = vsel %vm386, nan, %v396
        %399 = vrot.lane.b32.xlu0 %v293, 16
        %v400 = vpop.permute.xlu0 %399
        %vm402 = vcmask 130048
        %v403 = vsel %vm402, %v293, %v400
        %vm404 = vcmask 261120
        %405 = vst.msk [vmem:[%s165] sm:$0xff] %vm404, %v403
        %407 = vrot.lane.b32.xlu0 %v397, 16
        %v408 = vpop.permute.xlu0 %407
        %v410 = vsel %vm402, %v397, %v408
        %411 = vst.msk [vmem:[%s172] sm:$0xff] %vm404, %v410
        %s412 = sand.u32 %s76, 1
        %s413 = scalar_lea.sflag [#allocation3], %s412
        %s414 = sand.u32 %s76, 1
        %s415 = smul.addr %s414, 8
        %s416 = scalar_lea.vmem [#allocation2], %s415
        %s417 = sand.u32 %s102, 1
        %s418 = scalar_lea.sflag [#allocation5], %s417
        %s419 = sand.u32 %s102, 1
        %s420 = smul.addr %s419, 8
        %s421 = scalar_lea.vmem [#allocation4], %s420
        // Predicated region
        $region29: #{tpu_custom_call.1} parent=27 // pred_check
          %p422 = pneg %p86
        $region30: #{tpu_custom_call.1} parent=27 // pred_check_branch
          %424 = sbr.rel (%p422) target = $region32
        $region31: #{tpu_custom_call.1} parent=27 // pred_region
          %s426 = ssub.s32 128, 128
          %427 = vsyncadd %s413, %s426
          %s428 = smul.addr %s21, 128
          %s429 = scalar_lea.hbm %s2, %s428
          %s431 = sshll.u32 %s416, 4
          %s432 = int_to_ptr.vmem [resolvable:$true] %s431
          %434 = dma.vmem_to_hbm [thread:$0]  %s432, 128, %s429, %s413
        $region32: #{tpu_custom_call.1} parent=27 // pred_fallthru
          _
        // Predicated region
        $region33: #{tpu_custom_call.1} parent=27 // pred_check
          %p435 = pneg %p112
        $region34: #{tpu_custom_call.1} parent=27 // pred_check_branch
          %437 = sbr.rel (%p435) target = $region36
        $region35: #{tpu_custom_call.1} parent=27 // pred_region
          %s439 = ssub.s32 128, 128
          %440 = vsyncadd %s418, %s439
          %s441 = smul.addr %s21, 128
          %s442 = scalar_lea.hbm %s3, %s441
          %s444 = sshll.u32 %s421, 4
          %s445 = int_to_ptr.vmem [resolvable:$true] %s444
          %447 = dma.vmem_to_hbm [thread:$0]  %s445, 128, %s442, %s418
        $region36: #{tpu_custom_call.1} parent=27 // pred_fallthru
          _
      $region28: #{tpu_custom_call.1} parent=5 // pred_fallthru
        _
      %p448 = scmp.le.s32.totalorder 2, %s16
      // Predicated region
      $region37: #{tpu_custom_call.1} parent=5 // pred_check
        %p449 = pneg %p448
      $region38: #{tpu_custom_call.1} parent=5 // pred_check_branch
        %451 = sbr.rel (%p449) target = $region40
      $region39: #{tpu_custom_call.1} parent=5 // pred_region
        %s452 = ssub.s32 %s16, 2
        // Predicated region
        $region41: #{tpu_custom_call.1} parent=39 // pred_check
          %p453 = pneg %p92
        $region42: #{tpu_custom_call.1} parent=39 // pred_check_branch
          %455 = sbr.rel (%p453) target = $region44
        $region43: #{tpu_custom_call.1} parent=39 // pred_region
          %s456 = sand.u32 %s77, 1
          %s457 = scalar_lea.sflag [#allocation3], %s456
          %s458 = sand.u32 %s77, 1
          %s459 = smul.addr %s458, 8
          %s460 = scalar_lea.vmem [#allocation2], %s459
          %461 = dma.done %s457, 128
        $region44: #{tpu_custom_call.1} parent=39 // pred_fallthru
          _
        // Predicated region
        $region45: #{tpu_custom_call.1} parent=39 // pred_check
          %p462 = pneg %p118
        $region46: #{tpu_custom_call.1} parent=39 // pred_check_branch
          %464 = sbr.rel (%p462) target = $region48
        $region47: #{tpu_custom_call.1} parent=39 // pred_region
          %s465 = sand.u32 %s103, 1
          %s466 = scalar_lea.sflag [#allocation5], %s465
          %s467 = sand.u32 %s103, 1
          %s468 = smul.addr %s467, 8
          %s469 = scalar_lea.vmem [#allocation4], %s468
          %470 = dma.done %s466, 128
        $region48: #{tpu_custom_call.1} parent=39 // pred_fallthru
          _
      $region40: #{tpu_custom_call.1} parent=5 // pred_fallthru
        _
    $region6: #{tpu_custom_call.1} parent=1 // loop_footer
      %s20 = sadd.s32 1, %s16
    $region7: #{tpu_custom_call.1} parent=1 // loop_footer_branch
      %15 = sbr.rel target = $region3
    $region8: #{tpu_custom_call.1} parent=1 // loop_exit
      _
    %471 = vsyncpa [#allocation3], 1
    %s472 = scalar_lea.sflag [#allocation3], 1
    %473 = vsyncpa %s472, 1
    %474 = vsyncpa [#allocation5], 1
    %s475 = scalar_lea.sflag [#allocation5], 1
    %476 = vsyncpa %s475, 1

</llo_original>
